<compile_context>
chip_gen: v5e
topology: v5e:2x2
jax: 0.10.0
libtpu: 0.0.40
codegen_flags: <defaults>
</compile_context>

<pallas_src>
import functools

import jax
import jax.numpy as jnp
from jax.experimental import pallas as pl
from jax.experimental.pallas import tpu as pltpu


def _pgn_kernel(x_ref, w_ref, b_ref, o_ref, *, G, T, V):
    # x_ref: (G*T, D)  row tile of the flat .view buffer (mxu dtype)
    # w_ref: (D, Vp)   padded weight (mxu dtype), resident across grid steps
    # b_ref: (1, Vp)   f32 bias with -1e30 baked into pad columns
    # o_ref: (G, Vp)   mean-over-tokens log-probs; pad cols are garbage and
    #                  are sliced off in the wrapper.
    rows = G * T
    Vp = w_ref.shape[1]

    # Logits on the MXU with f32 accumulation.  Pad vocab columns carry
    # bias = -1e30, so they fall out of the logsumexp with no masking pass.
    y = jnp.dot(x_ref[...], w_ref[...],
                preferred_element_type=jnp.float32) + b_ref[...]      # (rows, Vp)

    # Per-row logsumexp (all f32; exp/log ride the EUP).
    m = jnp.max(y, axis=-1, keepdims=True)                            # (rows, 1)
    lse = m + jnp.log(jnp.sum(jnp.exp(y - m), axis=-1, keepdims=True))

    # Stash lse into the guaranteed spare pad column V so ONE selection
    # matmul produces both the per-group logit means and the lse mean.
    col = jax.lax.broadcasted_iota(jnp.int32, (rows, Vp), 1)
    y_aug = jnp.where(col == V, lse, y)                               # (rows, Vp)

    # S[g, r] = 1/T iff row r belongs to group g (rows g*T .. g*T + T - 1
    # under the torch .view layout).  Kept f32: mean precision matters and
    # this dot is tiny next to x @ W.
    rg = jax.lax.broadcasted_iota(jnp.int32, (G, rows), 0)
    rr = jax.lax.broadcasted_iota(jnp.int32, (G, rows), 1)
    S = jnp.where((rr >= rg * T) & (rr < (rg + 1) * T),
                  jnp.float32(1.0 / T), jnp.float32(0.0))             # (G, rows)

    means = jnp.dot(S, y_aug, preferred_element_type=jnp.float32)     # (G, Vp)
    # mean_t(log_softmax) = mean_t(logits) - mean_t(lse)
    o_ref[...] = means - means[:, V:V + 1]


def pad_pgn_params(w, b, *, mxu_dtype=jnp.bfloat16, lane=128):
    """Pad Linear(x_dim -> v_dim) params ONCE at setup (hoisted out of the
    per-call path).  Reserves at least one spare lane-pad column for the
    fused in-kernel lse and bakes the vocab-pad mask (-1e30) into the bias."""
    D, V = w.shape
    Vp = pl.cdiv(V + 1, lane) * lane
    w_pad = jnp.zeros((D, Vp), mxu_dtype).at[:, :V].set(w.astype(mxu_dtype))
    b_pad = jnp.full((1, Vp), -1e30, jnp.float32).at[:, :V].set(
        jnp.reshape(b, (1, V)).astype(jnp.float32))
    return w_pad, b_pad, V


def _pick_groups_per_tile(B, T, D, Vp, x_itemsize, budget_bytes=20 << 20):
    """Largest number of batch groups per row tile such that
       * G divides B (no partial tiles feeding the selection matmul),
       * blocks stay (8,128)-legal (G == B or G % 8 == 0),
       * the per-tile VMEM working set fits the budget (weight/bias counted
         double-buffered, x tile double-buffered, f32 logits temp, output)."""
    base = 2 * (D * Vp * x_itemsize + Vp * 4)        # resident W + bias (x2 bufs)
    best = None
    for G in range(1, B + 1):
        if B % G:
            continue
        if G != B and G % 8:
            continue
        rows = G * T
        need = (base + 2 * rows * D * x_itemsize     # x tile, double-buffered
                + rows * Vp * 4                      # f32 logits temp
                + 2 * G * Vp * 4)                    # output tile, double-buffered
        if need <= budget_bytes:
            best = G
    if best is None:
        best = 8 if B % 8 == 0 else B                # smallest legal tile
    return best


def prob_generator_network(x, w_pad, b_pad, v_dim):
    """x: (Tokens, Batch, Dim); padded params from pad_pgn_params.
    Returns (Batch, 1, v_dim)."""
    T, B, D = x.shape
    Vp = w_pad.shape[1]
    BT = B * T
    mxu_dtype = w_pad.dtype

    # torch `x.view(B, T, D)` on a contiguous (T, B, D) tensor is a flat
    # reinterpretation (not a transpose): flatten straight to (B*T, D).
    x_flat = jnp.reshape(x, (BT, D)).astype(mxu_dtype)

    G = _pick_groups_per_tile(B, T, D, Vp, jnp.dtype(mxu_dtype).itemsize)
    rows = G * T
    kernel = functools.partial(_pgn_kernel, G=G, T=T, V=v_dim)

    out_pad = pl.pallas_call(
        kernel,
        out_shape=jax.ShapeDtypeStruct((B, Vp), jnp.float32),
        grid=(B // G,),
        in_specs=[
            pl.BlockSpec((rows, D), lambda i: (i, 0)),   # row tile of x
            pl.BlockSpec((D, Vp), lambda i: (0, 0)),     # weight stays resident
            pl.BlockSpec((1, Vp), lambda i: (0, 0)),     # bias stays resident
        ],
        out_specs=pl.BlockSpec((G, Vp), lambda i: (i, 0)),
        compiler_params=pltpu.CompilerParams(
            # row tiles are independent -> shard across TCs on v7x megacore
            dimension_semantics=("parallel",),
            vmem_limit_bytes=32 << 20),
    )(x_flat, w_pad, b_pad)

    # Keep real vocab columns (pad cols hold garbage by design) and restore
    # the torch output shape (B, 1, V).
    return out_pad[:, :v_dim][:, None, :]


def reference(x, w, b):
    T, B, D = x.shape
    x2 = jnp.reshape(x, (B, T, D))
    y = x2 @ w + jnp.reshape(b, (1, 1, -1))
    logp = jax.nn.log_softmax(y, axis=-1)
    return jnp.mean(logp, axis=1)[:, None, :]


if __name__ == "__main__":
    T, B = 8, 2          # Tokens, Batch
    x_dim, v_dim = 32, 16

    key = jax.random.PRNGKey(0)
    kx, kw, kb = jax.random.split(key, 3)

    x = jax.random.normal(kx, (T, B, x_dim), dtype=jnp.float32)

    # Deterministic Linear(x_dim, v_dim) params (torch default init range).
    bound = 1.0 / jnp.sqrt(jnp.float32(x_dim))
    w_t = jax.random.uniform(kw, (v_dim, x_dim), jnp.float32, -bound, bound)
    w = w_t.T                                                  # (x_dim, v_dim)
    b = jax.random.uniform(kb, (1, v_dim), jnp.float32, -bound, bound)

    ref = reference(x, w, b)

    # Exact-semantics path (f32 MXU operands): must match reference tightly.
    w_pad32, b_pad32, V = pad_pgn_params(w, b, mxu_dtype=jnp.float32)
    out_f32 = jax.block_until_ready(prob_generator_network(x, w_pad32, b_pad32, V))
    assert out_f32.shape == (B, 1, v_dim), out_f32.shape
    assert jnp.allclose(out_f32, ref, atol=1e-5, rtol=1e-5), "f32 mismatch vs reference"

    # Production path (bf16 MXU operands, f32 accumulate / logsumexp):
    # per-review recommendation for v6e/v7x; sanity-checked at a loose tol.
    w_pad16, b_pad16, V = pad_pgn_params(w, b, mxu_dtype=jnp.bfloat16)
    out_bf16 = jax.block_until_ready(prob_generator_network(x, w_pad16, b_pad16, V))
    assert out_bf16.shape == (B, 1, v_dim), out_bf16.shape
    assert jnp.allclose(out_bf16, ref, atol=5e-2, rtol=0), "bf16 path out of tolerance"

    print("KERNEL_OK")
</pallas_src>

<mosaic_0001>
module attributes {stable_mosaic.version = 11 : i64} {
  func.func @_pgn_kernel(%arg0: i32, %arg1: memref<16x32xf32, #tpu.memory_space<vmem>>, %arg2: memref<32x128xf32, #tpu.memory_space<vmem>>, %arg3: memref<1x128xf32, #tpu.memory_space<vmem>>, %arg4: memref<2x128xf32, #tpu.memory_space<vmem>>) attributes {dimension_semantics = [#tpu.dimension_semantics<parallel>], iteration_bounds = array<i64: 1>, scalar_prefetch = 0 : i64, scratch_operands = 0 : i64, tpu.core_type = #tpu.core_type<tc>, window_params = [{transform_indices = @transform_0, window_bounds = array<i64: 16, 32>}, {pipeline_mode = #tpu.pipeline_mode<synchronous>, transform_indices = @transform_1, window_bounds = array<i64: 32, 128>}, {pipeline_mode = #tpu.pipeline_mode<synchronous>, transform_indices = @transform_2, window_bounds = array<i64: 1, 128>}, {transform_indices = @transform_3, window_bounds = array<i64: 2, 128>}]} {
    %c0 = arith.constant 0 : index
    %c0_0 = arith.constant 0 : index
    %0 = vector.load %arg1[%c0, %c0_0] : memref<16x32xf32, #tpu.memory_space<vmem>>, vector<16x32xf32>
    %c0_1 = arith.constant 0 : index
    %c0_2 = arith.constant 0 : index
    %1 = vector.load %arg2[%c0_1, %c0_2] : memref<32x128xf32, #tpu.memory_space<vmem>>, vector<32x128xf32>
    %cst = arith.constant dense<0.000000e+00> : vector<16x128xf32>
    %2 = tpu.matmul %0, %1, %cst {dimension_numbers = #tpu.dot_dimension_numbers<[1], [0], [0], [1], [0, 0, 1, 1], [], []>} : vector<16x32xf32>, vector<32x128xf32>, vector<16x128xf32> -> vector<16x128xf32>
    %c0_3 = arith.constant 0 : index
    %c0_4 = arith.constant 0 : index
    %3 = vector.load %arg3[%c0_3, %c0_4] : memref<1x128xf32, #tpu.memory_space<vmem>>, vector<1x128xf32>
    %4 = vector.broadcast %3 : vector<1x128xf32> to vector<16x128xf32>
    %5 = arith.addf %2, %4 : vector<16x128xf32>
    %cst_5 = arith.constant dense<0xFF800000> : vector<16xf32>
    %6 = vector.multi_reduction <maximumf>, %5, %cst_5 [1] : vector<16x128xf32> to vector<16xf32>
    %7 = vector.shape_cast %6 : vector<16xf32> to vector<16x1xf32>
    %8 = vector.broadcast %7 : vector<16x1xf32> to vector<16x128xf32>
    %9 = arith.subf %5, %8 : vector<16x128xf32>
    %10 = math.exp %9 : vector<16x128xf32>
    %cst_6 = arith.constant dense<0.000000e+00> : vector<16xf32>
    %11 = vector.multi_reduction <add>, %10, %cst_6 [1] : vector<16x128xf32> to vector<16xf32>
    %12 = vector.shape_cast %11 : vector<16xf32> to vector<16x1xf32>
    %13 = math.log %12 : vector<16x1xf32>
    %14 = arith.addf %7, %13 : vector<16x1xf32>
    %15 = tpu.iota {dimensions = array<i32: 1>} : vector<16x128xi32>
    %c16_i32 = arith.constant 16 : i32
    %16 = vector.broadcast %c16_i32 : i32 to vector<16x128xi32>
    %17 = arith.cmpi eq, %15, %16 : vector<16x128xi32>
    %18 = vector.shape_cast %14 : vector<16x1xf32> to vector<16x1xf32>
    %19 = vector.broadcast %18 : vector<16x1xf32> to vector<16x128xf32>
    %20 = arith.select %17, %19, %5 : vector<16x128xi1>, vector<16x128xf32>
    %21 = tpu.iota {dimensions = array<i32: 0>} : vector<2x16xi32>
    %22 = tpu.iota {dimensions = array<i32: 1>} : vector<2x16xi32>
    %c8_i32 = arith.constant 8 : i32
    %23 = vector.broadcast %c8_i32 : i32 to vector<2x16xi32>
    %24 = arith.muli %21, %23 : vector<2x16xi32>
    %25 = arith.cmpi sge, %22, %24 : vector<2x16xi32>
    %c1_i32 = arith.constant 1 : i32
    %26 = vector.broadcast %c1_i32 : i32 to vector<2x16xi32>
    %27 = arith.addi %21, %26 : vector<2x16xi32>
    %c8_i32_7 = arith.constant 8 : i32
    %28 = vector.broadcast %c8_i32_7 : i32 to vector<2x16xi32>
    %29 = arith.muli %27, %28 : vector<2x16xi32>
    %30 = arith.cmpi slt, %22, %29 : vector<2x16xi32>
    %31 = arith.andi %25, %30 : vector<2x16xi1>
    %cst_8 = arith.constant 1.250000e-01 : f32
    %cst_9 = arith.constant 0.000000e+00 : f32
    %32 = vector.broadcast %cst_8 : f32 to vector<2x16xf32>
    %33 = vector.broadcast %cst_9 : f32 to vector<2x16xf32>
    %34 = arith.select %31, %32, %33 : vector<2x16xi1>, vector<2x16xf32>
    %cst_10 = arith.constant dense<0.000000e+00> : vector<2x128xf32>
    %35 = tpu.matmul %34, %20, %cst_10 {dimension_numbers = #tpu.dot_dimension_numbers<[1], [0], [0], [1], [0, 0, 1, 1], [], []>} : vector<2x16xf32>, vector<16x128xf32>, vector<2x128xf32> -> vector<2x128xf32>
    %36 = vector.extract_strided_slice %35 {offsets = [0, 16], sizes = [2, 1], strides = [1, 1]} : vector<2x128xf32> to vector<2x1xf32>
    %37 = vector.broadcast %36 : vector<2x1xf32> to vector<2x128xf32>
    %38 = arith.subf %35, %37 : vector<2x128xf32>
    %c0_11 = arith.constant 0 : index
    %c0_12 = arith.constant 0 : index
    %39 = vector.load %arg4[%c0_11, %c0_12] : memref<2x128xf32, #tpu.memory_space<vmem>>, vector<2x128xf32>
    tpu.vector_store %arg4[%c0_11, %c0_12], %38 {strides = array<i32>} : memref<2x128xf32, #tpu.memory_space<vmem>>, vector<2x128xf32>,
    return
  }
  func.func @transform_0(%arg0: i32) -> (i32, i32) {
    %c0_i32 = arith.constant 0 : i32
    %c0_i32_0 = arith.constant 0 : i32
    return %arg0, %c0_i32 : i32, i32
  }
  func.func @transform_1(%arg0: i32) -> (i32, i32) {
    %c0_i32 = arith.constant 0 : i32
    %c0_i32_0 = arith.constant 0 : i32
    %c0_i32_1 = arith.constant 0 : i32
    return %c0_i32, %c0_i32_0 : i32, i32
  }
  func.func @transform_2(%arg0: i32) -> (i32, i32) {
    %c0_i32 = arith.constant 0 : i32
    %c0_i32_0 = arith.constant 0 : i32
    %c0_i32_1 = arith.constant 0 : i32
    return %c0_i32, %c0_i32_0 : i32, i32
  }
  func.func @transform_3(%arg0: i32) -> (i32, i32) {
    %c0_i32 = arith.constant 0 : i32
    %c0_i32_0 = arith.constant 0 : i32
    return %arg0, %c0_i32 : i32, i32
  }
}

</mosaic_0001>

<llo_original>
// kernel: tpu_custom_call.1
$region0: #{tpu_custom_call.1}
  #allocation0 [shape = 'u32[]', space=smem, size = 0x4, offset = 0x4, fixed_abs, tag = 'smem constant byte address 0x4 - core index']
  #allocation1 [shape = 'u32[72,128]{1,0:T(1,128)}', space=vmem, size = 0x9000, scoped, tag = 'internal scratch']
  %s0 = inlined_call_operand.hbm [shape: f32[16,32], index: 0, kind: input, shape index: {}]
  %s1 = inlined_call_operand.hbm [shape: f32[32,128], index: 1, kind: input, shape index: {}]
  %s2 = inlined_call_operand.vmem [shape: f32[1,128], index: 2, kind: input, shape index: {}]
  %s3 = inlined_call_operand.hbm [shape: f32[2,128], index: 3, kind: output, shape index: {}]
  %s4 = sld [smem:[#allocation0]]
  $region30: #{tpu_custom_call.1} parent=0
    _
  %s6 = ssub.s32 1, %s4
  %s7 = scalar_select 0, %s6, %s4
  $region1: #{tpu_custom_call.1} parent=0
    #allocation2 [shape = 'u8[8192]{0}', space=vmem, size = 0x2000, scoped, tag = 'input window, operand 0, single buffered']
    #allocation3 [shape = 's32[1]{0}', space=sflag, size = 0x4, scoped, tag = 'scoped memory for tpu_custom_call.1']
    #allocation4 [shape = 's32[1]{0}', space=sflag, size = 0x4, scoped, tag = 'scoped memory for tpu_custom_call.1']
    #allocation5 [shape = 'u8[16384]{0}', space=vmem, size = 0x4000, scoped, tag = 'input window, operand 1, single buffered']
    #allocation6 [shape = 's32[1]{0}', space=sflag, size = 0x4, scoped, tag = 'scoped memory for tpu_custom_call.1']
    #allocation7 [shape = 'u8[1024]{0}', space=vmem, size = 0x400, scoped, tag = 'output window, operand 0, single buffered']
    %8 = vsyncpa [#allocation3], 0
    %9 = vsyncpa [#allocation6], 0
    %10 = vsyncpa [#allocation4], 0
    // Predicated region
    $region2: #{tpu_custom_call.1} parent=1 // pred_check
      _
    $region3: #{tpu_custom_call.1} parent=1 // pred_check_branch
      %12 = sbr.rel (0) target = $region5
    $region4: #{tpu_custom_call.1} parent=1 // pred_region
      %14 = vsyncadd [#allocation3], 0
      %s15 = sshll.u32 %s0, 4
      %s16 = int_to_ptr.hbm [resolvable:$true] %s15
      %s17 = sshll.u32 [#allocation2], 4
      %s18 = int_to_ptr.vmem [resolvable:$true] %s17
      %23 = dma.hbm_to_vmem [thread:$0]  %s16, 256, %s18, [#allocation3], 128, 128, 8
    $region5: #{tpu_custom_call.1} parent=1 // pred_fallthru
      _
    // Predicated region
    $region6: #{tpu_custom_call.1} parent=1 // pred_check
      _
    $region7: #{tpu_custom_call.1} parent=1 // pred_check_branch
      %25 = sbr.rel (0) target = $region9
    $region8: #{tpu_custom_call.1} parent=1 // pred_region
      %27 = vsyncadd [#allocation6], 0
      %s28 = sshll.u32 %s1, 4
      %s29 = int_to_ptr.hbm [resolvable:$true] %s28
      %s30 = sshll.u32 [#allocation5], 4
      %s31 = int_to_ptr.vmem [resolvable:$true] %s30
      %36 = dma.hbm_to_vmem [thread:$0]  %s29, 512, %s31, [#allocation6], 128, 128, 8
    $region9: #{tpu_custom_call.1} parent=1 // pred_fallthru
      _
    // Predicated region
    $region10: #{tpu_custom_call.1} parent=1 // pred_check
      _
    $region11: #{tpu_custom_call.1} parent=1 // pred_check_branch
      %38 = sbr.rel (0) target = $region13
    $region12: #{tpu_custom_call.1} parent=1 // pred_region
      _
    $region13: #{tpu_custom_call.1} parent=1 // pred_fallthru
      _
    // Predicated region
    $region14: #{tpu_custom_call.1} parent=1 // pred_check
      _
    $region15: #{tpu_custom_call.1} parent=1 // pred_check_branch
      %40 = sbr.rel (0) target = $region17
    $region16: #{tpu_custom_call.1} parent=1 // pred_region
      %42 = dma.done [#allocation3], 256
    $region17: #{tpu_custom_call.1} parent=1 // pred_fallthru
      _
    // Predicated region
    $region18: #{tpu_custom_call.1} parent=1 // pred_check
      _
    $region19: #{tpu_custom_call.1} parent=1 // pred_check_branch
      %44 = sbr.rel (0) target = $region21
    $region20: #{tpu_custom_call.1} parent=1 // pred_region
      %46 = dma.done [#allocation6], 512
    $region21: #{tpu_custom_call.1} parent=1 // pred_fallthru
      _
    %v47 = vld [vmem:[#allocation2] sm:$0xff]
    %v48 = vld [vmem:[#allocation2 + $0x8] sm:$0xff]
    %v49 = vld [vmem:[#allocation5] sm:$0xff]
    %v50 = vld [vmem:[#allocation5 + $0x8] sm:$0xff]
    %v51 = vld [vmem:[#allocation5 + $0x10] sm:$0xff]
    %v52 = vld [vmem:[#allocation5 + $0x18] sm:$0xff]
    %v53 = vld [vmem:[%s2] sm:$0x1]
    %v55 = vperm.slane %v53, 0
    %vm57 = vcmask 261120
    %v59 = vsel %vm57, %v47, 0
    %v62 = vsel %vm57, %v48, 0
    %64 = vmatpush.msra.mxu0 0.0
    %65 = vmatpush.msra.mxu0 0.0
    %66 = vmatpush.msra.mxu0 0.0
    %67 = vmatpush.msra.mxu0 0.0
    %68 = vmatpush.msra.mxu0 0.0
    %69 = vmatpush.msra.mxu0 0.0
    %70 = vmatpush.msra.mxu0 0.0
    %71 = vmatpush.msra.mxu0 0.0
    %72 = vmatpush.msra.mxu0 0.0
    %73 = vmatpush.msra.mxu0 0.0
    %74 = vmatpush.msra.mxu0 0.0
    %75 = vmatpush.msra.mxu0 0.0
    %76 = vmatpush.msra.mxu0 %v52
    %77 = vmatpush.msra.mxu0 %v51
    %78 = vmatpush.msra.mxu0 %v50
    %79 = vmatpush.msra.mxu0 %v49
    %80 = vmatmul.f32.gmra.mxu0 %v59
    %v81 = vpop.f32.mrf.mxu0
    %v82 = vadd.f32 %v55, %v81
    %83 = vmatmul.f32.gmra.mxu0 %v62
    %v84 = vpop.f32.mrf.mxu0
    %v85 = vadd.f32 %v55, %v84
    %86 = vdwg.mxu0
    %87 = vmax.xlane.f32.xlu0 %v82
    %v88 = vpop.xlane.xlu0 %87
    %89 = vmax.xlane.f32.xlu0 %v85
    %v90 = vpop.xlane.xlu0 %89
    %v91 = vsub.f32 %v82, %v88
    %v92 = vsub.f32 %v85, %v90
    %v93 = vmul.f32 %v91, 1.442695
    %v94 = vpow.pop %v93
    %v95 = vmul.f32 %v92, 1.442695
    %v96 = vpow.pop %v95
    %97 = vadd.xlane.f32.xlu0 %v94
    %v98 = vpop.xlane.xlu0 %97
    %99 = vadd.xlane.f32.xlu0 %v96
    %v100 = vpop.xlane.xlu0 %99
    %v101 = vlog2.pop %v98
    %v102 = vmul.f32 %v101, 0.6931472
    %v103 = vlog2.pop %v100
    %v104 = vmul.f32 %v103, 0.6931472
    %v105 = vadd.f32 %v88, %v102
    %v106 = vadd.f32 %v90, %v104
    %v107 = vlaneseq
    %v108 = vand.u32 %v107, 127
    %vm109 = vcmp.eq.s32.totalorder %v108, 16
    %v110 = vsel %vm109, %v105, %v82
    %v111 = vsel %vm109, %v106, %v85
    %v112 = vlaneseq
    %v113 = vshrl.u32 %v112, 7
    %v114 = vmul.u32 %v113, 8
    %vm115 = vcmp.ge.s32.totalorder %v108, %v114
    %v116 = vadd.s32 %v113, 1
    %v117 = vmul.u32 %v116, 8
    %vm118 = vcmp.lt.s32.totalorder %v108, %v117
    %vm119 = vmand %vm115, %vm118
    %v120 = vsel %vm119, 0.125, 0.0
    %vm121 = vcmask 130048
    %v123 = vsel %vm121, %v120, 0
    %125 = vmatpush.msra.mxu0 0.0
    %126 = vmatpush.msra.mxu0 0.0
    %127 = vmatpush.msra.mxu0 0.0
    %128 = vmatpush.msra.mxu0 0.0
    %129 = vmatpush.msra.mxu0 0.0
    %130 = vmatpush.msra.mxu0 0.0
    %131 = vmatpush.msra.mxu0 0.0
    %132 = vmatpush.msra.mxu0 0.0
    %133 = vmatpush.msra.mxu0 0.0
    %134 = vmatpush.msra.mxu0 0.0
    %135 = vmatpush.msra.mxu0 0.0
    %136 = vmatpush.msra.mxu0 0.0
    %137 = vmatpush.msra.mxu0 0.0
    %138 = vmatpush.msra.mxu0 0.0
    %139 = vmatpush.msra.mxu0 %v111
    %140 = vmatpush.msra.mxu0 %v110
    %141 = vmatmul.f32.gmra.mxu0 %v123
    %v142 = vpop.f32.mrf.mxu0
    %v143 = vadd.f32 0.0, %v142
    %144 = vdwg.mxu0
    %146 = vset.pattern.permute.xlu0 16
    %147 = vperm.xlu0 %146, %v143
    %v148 = vpop.permute.xlu0 %147
    %v150 = vsub.f32 %v143, %v148
    %151 = vst [vmem:[#allocation7] sm:$0x3] %v150
    // Predicated region
    $region22: #{tpu_custom_call.1} parent=1 // pred_check
      _
    $region23: #{tpu_custom_call.1} parent=1 // pred_check_branch
      %153 = sbr.rel (0) target = $region25
    $region24: #{tpu_custom_call.1} parent=1 // pred_region
      %155 = vsyncadd [#allocation4], 0
      %s157 = sshll.u32 [#allocation7], 4
      %s158 = int_to_ptr.vmem [resolvable:$true] %s157
      %s159 = sshll.u32 %s3, 4
      %s160 = int_to_ptr.hbm [resolvable:$true] %s159
      %162 = dma.vmem_to_hbm [thread:$0]  %s158, 32, %s160, [#allocation4]
    $region25: #{tpu_custom_call.1} parent=1 // pred_fallthru
      _
    // Predicated region
    $region26: #{tpu_custom_call.1} parent=1 // pred_check
      _
    $region27: #{tpu_custom_call.1} parent=1 // pred_check_branch
      %164 = sbr.rel (0) target = $region29
    $region28: #{tpu_custom_call.1} parent=1 // pred_region
      %166 = dma.done [#allocation4], 32
    $region29: #{tpu_custom_call.1} parent=1 // pred_fallthru
      _
    %167 = vsyncpa [#allocation3], 1
    %168 = vsyncpa [#allocation6], 1
    %169 = vsyncpa [#allocation4], 1

</llo_original>
